<compile_context>
chip_gen: v7x
topology: tpu7x:2x2x1
jax: 0.10.0
libtpu: 0.0.40
codegen_flags: <defaults>
</compile_context>

<pallas_src>
import math

import jax
import jax.numpy as jnp
from jax import lax
from jax.experimental import pallas as pl
from jax.experimental.pallas import tpu as pltpu


def _round_up(x, m):
    return ((x + m - 1) // m) * m


# ----------------------------------------------------------------------------- kernel helpers
def _mlp_softplus(h, w_ref, b_ref, n_mlp):
    """ValueMLP (dropout = identity at inference) + stable softplus epilogue.
    h is f32; each layer casts to bf16 for a native MXU pass, accumulates in f32."""
    # TODO(synk): training-mode stochastic dropout not implemented; eval semantics used.
    for i in range(n_mlp):
        h = jnp.dot(h.astype(jnp.bfloat16), w_ref[3 + i],
                    preferred_element_type=jnp.float32) + b_ref[3 + i:4 + i, :]
        if i < n_mlp - 1:
            h = jnp.maximum(h, 0.0)                      # ReLU
    # log(1+exp(x)) = max(x,0) + log1p(exp(-|x|))
    return jnp.maximum(h, 0.0) + jnp.log1p(jnp.exp(-jnp.abs(h)))


def _make_kernel(n_actual: int, n_pad: int, n_mlp: int, use_attention: bool):
    """Fused forward for one attention group, specialized at trace time."""

    if not use_attention:
        # N == 1: softmax of a [1,1] score is 1 => fused output == V. Skip Q/K entirely.
        def kernel(mol_ref, w_ref, b_ref, out_ref):
            v = jnp.dot(mol_ref[...], w_ref[2],
                        preferred_element_type=jnp.float32) + b_ref[2:3, :]
            out_ref[...] = _mlp_softplus(v, w_ref, b_ref, n_mlp)
        return kernel

    def kernel(mol_ref, text_ref, w_ref, b_ref, out_ref):
        text = text_ref[...]                              # bf16 [n_pad, K]
        # Wq / bq already carry 1/sqrt(d_model) (folded at pack time).
        q = jnp.dot(text, w_ref[0], preferred_element_type=jnp.float32) + b_ref[0:1, :]
        k = jnp.dot(text, w_ref[1], preferred_element_type=jnp.float32) + b_ref[1:2, :]
        v = jnp.dot(mol_ref[...], w_ref[2],
                    preferred_element_type=jnp.float32) + b_ref[2:3, :]

        # scores = Q K^T, contracting the lane axes (no transpose materialized).
        scores = lax.dot_general(q.astype(jnp.bfloat16), k.astype(jnp.bfloat16),
                                 dimension_numbers=(((1,), (1,)), ((), ())),
                                 preferred_element_type=jnp.float32)

        if n_actual < n_pad:
            # Mask padded key columns so row padding does not change the softmax.
            col = lax.broadcasted_iota(jnp.int32, (n_pad, n_pad), 1)
            scores = jnp.where(col < n_actual, scores, -1e30)

        s_max = jnp.max(scores, axis=-1, keepdims=True)
        e = jnp.exp(scores - s_max)
        denom = jnp.sum(e, axis=-1, keepdims=True)        # >= 1 (max term contributes 1)
        inv = pl.reciprocal(denom, approx=True)           # EUP slot
        inv = inv * (2.0 - denom * inv)                   # one Newton step -> ~f32 exact
        attn = e * inv

        h = jnp.dot(attn.astype(jnp.bfloat16), v.astype(jnp.bfloat16),
                    preferred_element_type=jnp.float32)
        out_ref[...] = _mlp_softplus(h, w_ref, b_ref, n_mlp)

    return kernel


def _make_value_kernel(n_mlp: int):
    """Batched independent N=1 requests: output == V -> MLP -> softplus."""
    def kernel(mol_ref, w_ref, b_ref, out_ref):
        v = jnp.dot(mol_ref[...], w_ref[2],
                    preferred_element_type=jnp.float32) + b_ref[2:3, :]
        out_ref[...] = _mlp_softplus(v, w_ref, b_ref, n_mlp)
    return kernel


# ----------------------------------------------------------------------------- params
def _linear_params(key, d_in, d_out):
    """Deterministic PyTorch-style Linear init: U(-1/sqrt(d_in), 1/sqrt(d_in))."""
    kw, kb = jax.random.split(key)
    bound = 1.0 / (d_in ** 0.5)
    w = jax.random.uniform(kw, (d_in, d_out), jnp.float32, -bound, bound)
    b = jax.random.uniform(kb, (1, d_out), jnp.float32, -bound, bound)
    return w, b


def init_params(key, d_molecule, d_text, d_model, n_layers, latent_dim):
    keys = jax.random.split(key, 3 + (n_layers + 1))
    wq, bq = _linear_params(keys[0], d_text, d_model)
    wk, bk = _linear_params(keys[1], d_text, d_model)
    wv, bv = _linear_params(keys[2], d_molecule, d_model)
    mlp = [_linear_params(keys[3], d_model, latent_dim)]
    for i in range(n_layers - 1):
        mlp.append(_linear_params(keys[4 + i], latent_dim, latent_dim))
    mlp.append(_linear_params(keys[3 + n_layers], latent_dim, 1))
    return {"wq": wq, "bq": bq, "wk": wk, "bk": bk, "wv": wv, "bv": bv, "mlp": mlp}


def pack_params(params, *, d_molecule, d_text, d_model, latent_dim):
    """One-time transform: pad to 128 lanes, fold 1/sqrt(d_model) into Wq/bq,
    pack every weight into ONE bf16 slab [3+L, K, 128] plus one f32 bias slab."""
    P = max(_round_up(d_model, 128), _round_up(latent_dim, 128), 128)
    K = max(_round_up(d_text, 128), _round_up(d_molecule, 128), P)
    inv_scale = 1.0 / math.sqrt(float(d_model))
    n_mlp = len(params["mlp"])

    def pad2(w):
        return jnp.zeros((K, P), jnp.float32).at[:w.shape[0], :w.shape[1]].set(
            w.astype(jnp.float32))

    slabs = [pad2(params["wq"] * inv_scale),          # [0] Wq (scale folded)
             pad2(params["wk"]),                       # [1] Wk
             pad2(params["wv"])]                       # [2] Wv
    slabs += [pad2(w) for (w, _) in params["mlp"]]     # [3:] MLP layers
    w_all = jnp.stack(slabs, axis=0).astype(jnp.bfloat16)        # [3+L, K, P] bf16

    biases = jnp.zeros((3 + n_mlp, P), jnp.float32)
    biases = biases.at[0, :d_model].set(params["bq"][0] * inv_scale)
    biases = biases.at[1, :d_model].set(params["bk"][0])
    biases = biases.at[2, :d_model].set(params["bv"][0])
    for i, (_, b) in enumerate(params["mlp"]):
        biases = biases.at[3 + i, :b.shape[1]].set(b[0])

    return {"w_all": w_all, "biases": biases, "P": P, "K": K, "n_mlp": n_mlp}


# ----------------------------------------------------------------------------- wrappers
def fusion_forward(molecule_embedding, text_embedding, packed):
    """Module-semantics forward for one group of N rows (rows attend to each other).
    Returns [N, 1] float32."""
    n = molecule_embedding.shape[0]
    n_pad = max(_round_up(n, 16), 16)                 # bf16 sublane packing
    P, K, n_mlp = packed["P"], packed["K"], packed["n_mlp"]

    def pad_rows(x):
        out = jnp.zeros((n_pad, K), jnp.float32).at[
            :x.shape[0], :x.shape[1]].set(x.astype(jnp.float32))
        return out.astype(jnp.bfloat16)

    mol_p = pad_rows(molecule_embedding)
    use_attention = n > 1
    kernel = _make_kernel(n, n_pad, n_mlp, use_attention)
    vmem = pl.BlockSpec(memory_space=pltpu.MemorySpace.VMEM)

    if use_attention:
        text_p = pad_rows(text_embedding)
        inputs = [mol_p, text_p, packed["w_all"], packed["biases"]]
        flops = 2 * n_pad * K * P * 3 + 4 * n_pad * n_pad * P + 2 * n_pad * P * P * n_mlp
        act_bytes = 2 * n_pad * K * 2
        trans = n_pad * n_pad + 2 * n_pad * P + n_pad
    else:
        inputs = [mol_p, packed["w_all"], packed["biases"]]
        flops = 2 * n_pad * K * P + 2 * n_pad * P * P * n_mlp
        act_bytes = n_pad * K * 2
        trans = 2 * n_pad * P
    bytes_acc = (int(packed["w_all"].size) * 2 + int(packed["biases"].size) * 4
                 + act_bytes + n_pad * P * 4)

    out_pad = pl.pallas_call(
        kernel,
        out_shape=jax.ShapeDtypeStruct((n_pad, P), jnp.float32),   # lane-dense output
        in_specs=[vmem] * len(inputs),
        out_specs=vmem,
        cost_estimate=pl.CostEstimate(flops=flops, transcendentals=trans,
                                      bytes_accessed=bytes_acc),
    )(*inputs)
    return out_pad[:n, :1]                            # host-side slice of the real value(s)


def fusion_forward_batched(molecule_embeddings, packed, *, tile_rows=128):
    """Batched independent N=1 requests (the module's `.item()` serving pattern).
    For a single-row request softmax([[s]]) == 1, so fused_output == V exactly and the
    text embedding does not influence the value; only molecule tiles are streamed while
    the weight slab stays VMEM-resident across the row-tile grid. Returns [B, 1] f32."""
    b = molecule_embeddings.shape[0]
    P, K, n_mlp = packed["P"], packed["K"], packed["n_mlp"]
    n_w = 3 + n_mlp
    num_tiles = pl.cdiv(b, tile_rows)
    b_pad = num_tiles * tile_rows

    mol_p = jnp.zeros((b_pad, K), jnp.float32).at[
        :b, :molecule_embeddings.shape[1]].set(
        molecule_embeddings.astype(jnp.float32)).astype(jnp.bfloat16)

    flops = 2 * b_pad * K * P + 2 * b_pad * P * P * n_mlp
    trans = 2 * b_pad * P
    bytes_acc = (int(packed["w_all"].size) * 2 + int(packed["biases"].size) * 4
                 + b_pad * K * 2 + b_pad * P * 4)

    out_pad = pl.pallas_call(
        _make_value_kernel(n_mlp),
        out_shape=jax.ShapeDtypeStruct((b_pad, P), jnp.float32),
        grid=(num_tiles,),
        in_specs=[
            pl.BlockSpec((tile_rows, K), lambda i: (i, 0)),       # streamed rows
            pl.BlockSpec((n_w, K, P), lambda i: (0, 0, 0)),       # weights: VMEM-resident
            pl.BlockSpec((n_w, P), lambda i: (0, 0)),             # biases:  VMEM-resident
        ],
        out_specs=pl.BlockSpec((tile_rows, P), lambda i: (i, 0)), # lane-dense slab
        compiler_params=pltpu.CompilerParams(
            dimension_semantics=("parallel",)),                   # v7x: 2 TCs split rows
        cost_estimate=pl.CostEstimate(flops=flops, transcendentals=trans,
                                      bytes_accessed=bytes_acc),
    )(mol_p, packed["w_all"], packed["biases"])
    return out_pad[:b, :1]


# ----------------------------------------------------------------------------- reference
def reference_forward(molecule_embedding, text_embedding, params, *, d_model):
    """Plain-JAX f32 reference mirroring the PyTorch module."""
    q = text_embedding @ params["wq"] + params["bq"]
    k = text_embedding @ params["wk"] + params["bk"]
    v = molecule_embedding @ params["wv"] + params["bv"]
    scores = (q @ k.T) / jnp.sqrt(jnp.float32(d_model))
    attn = jax.nn.softmax(scores, axis=-1)
    h = attn @ v
    for i, (w, b) in enumerate(params["mlp"]):
        h = h @ w + b
        if i < len(params["mlp"]) - 1:
            h = jnp.maximum(h, 0.0)
    return jnp.logaddexp(h, 0.0)                      # stable log(1 + exp(h))


def reference_value_batched(molecule_embeddings, params):
    """Reference for batched independent N=1 requests (fused_output == V)."""
    h = molecule_embeddings @ params["wv"] + params["bv"]
    for i, (w, b) in enumerate(params["mlp"]):
        h = h @ w + b
        if i < len(params["mlp"]) - 1:
            h = jnp.maximum(h, 0.0)
    return jnp.logaddexp(h, 0.0)


# ----------------------------------------------------------------------------- demo
if __name__ == "__main__":
    d_molecule, d_text, d_model = 32, 48, 32
    n_layers, latent_dim, dropout_rate = 2, 64, 0.1

    key = jax.random.PRNGKey(0)
    k_params, k_mol, k_text, k_batch = jax.random.split(key, 4)
    params = init_params(k_params, d_molecule, d_text, d_model, n_layers, latent_dim)
    packed = pack_params(params, d_molecule=d_molecule, d_text=d_text,
                         d_model=d_model, latent_dim=latent_dim)

    # Case 1: N = 1 — the module's `.item()` deployment (attention elided at trace time).
    mol1 = jax.random.normal(k_mol, (1, d_molecule), jnp.float32)
    txt1 = jax.random.normal(k_text, (1, d_text), jnp.float32)
    out1 = jax.block_until_ready(fusion_forward(mol1, txt1, packed))
    ref1 = reference_forward(mol1, txt1, params, d_model=d_model)
    assert out1.shape == (1, 1)
    assert jnp.allclose(out1, ref1, rtol=2e-2, atol=2e-2), (out1, ref1)
    value = float(out1[0, 0])                         # `.item()` equivalent (host-side)
    assert value >= 0.0                               # softplus output

    # Case 2: small group where rows attend to each other (bf16 weights, f32 accum).
    n = 5
    k_mol2, k_txt2 = jax.random.split(jax.random.PRNGKey(1))
    mol2 = jax.random.normal(k_mol2, (n, d_molecule), jnp.float32)
    txt2 = jax.random.normal(k_txt2, (n, d_text), jnp.float32)
    out2 = jax.block_until_ready(fusion_forward(mol2, txt2, packed))
    ref2 = reference_forward(mol2, txt2, params, d_model=d_model)
    assert out2.shape == (n, 1)
    assert jnp.allclose(out2, ref2, rtol=2e-2, atol=2e-2), (out2, ref2)

    # Case 3: batched independent N=1 requests — row-tile grid, VMEM-resident weights,
    # "parallel" row axis (dual-TC on v7x).
    B = 300
    molB = jax.random.normal(k_batch, (B, d_molecule), jnp.float32)
    outB = jax.block_until_ready(fusion_forward_batched(molB, packed))
    refB = reference_value_batched(molB, params)
    assert outB.shape == (B, 1)
    assert jnp.allclose(outB, refB, rtol=2e-2, atol=2e-2)

    print("KERNEL_OK")
</pallas_src>

<mosaic_0001>
module attributes {stable_mosaic.version = 11 : i64} {
  func.func @kernel(%arg0: memref<16x128xbf16, #tpu.memory_space<vmem>>, %arg1: memref<6x128x128xbf16, #tpu.memory_space<vmem>>, %arg2: memref<6x128xf32, #tpu.memory_space<vmem>>, %arg3: memref<16x128xf32, #tpu.memory_space<vmem>>) attributes {dimension_semantics = [], scalar_prefetch = 0 : i64, scratch_operands = 0 : i64, tpu.core_type = #tpu.core_type<tc>} {
    %c0 = arith.constant 0 : index
    %c0_0 = arith.constant 0 : index
    %0 = vector.load %arg0[%c0, %c0_0] : memref<16x128xbf16, #tpu.memory_space<vmem>>, vector<16x128xbf16>
    %c2 = arith.constant 2 : index
    %c0_1 = arith.constant 0 : index
    %c0_2 = arith.constant 0 : index
    %1 = vector.load %arg1[%c2, %c0_1, %c0_2] : memref<6x128x128xbf16, #tpu.memory_space<vmem>>, vector<1x128x128xbf16>
    %2 = vector.shape_cast %1 : vector<1x128x128xbf16> to vector<128x128xbf16>
    %cst = arith.constant dense<0.000000e+00> : vector<16x128xf32>
    %3 = tpu.matmul %0, %2, %cst {dimension_numbers = #tpu.dot_dimension_numbers<[1], [0], [0], [1], [0, 0, 1, 1], [], []>} : vector<16x128xbf16>, vector<128x128xbf16>, vector<16x128xf32> -> vector<16x128xf32>
    %c2_3 = arith.constant 2 : index
    %c0_4 = arith.constant 0 : index
    %4 = vector.load %arg2[%c2_3, %c0_4] : memref<6x128xf32, #tpu.memory_space<vmem>>, vector<1x128xf32>
    %5 = vector.broadcast %4 : vector<1x128xf32> to vector<16x128xf32>
    %6 = arith.addf %3, %5 : vector<16x128xf32>
    %7 = arith.truncf %6 : vector<16x128xf32> to vector<16x128xbf16>
    %c3 = arith.constant 3 : index
    %c0_5 = arith.constant 0 : index
    %c0_6 = arith.constant 0 : index
    %8 = vector.load %arg1[%c3, %c0_5, %c0_6] : memref<6x128x128xbf16, #tpu.memory_space<vmem>>, vector<1x128x128xbf16>
    %9 = vector.shape_cast %8 : vector<1x128x128xbf16> to vector<128x128xbf16>
    %cst_7 = arith.constant dense<0.000000e+00> : vector<16x128xf32>
    %10 = tpu.matmul %7, %9, %cst_7 {dimension_numbers = #tpu.dot_dimension_numbers<[1], [0], [0], [1], [0, 0, 1, 1], [], []>} : vector<16x128xbf16>, vector<128x128xbf16>, vector<16x128xf32> -> vector<16x128xf32>
    %c3_8 = arith.constant 3 : index
    %c0_9 = arith.constant 0 : index
    %11 = vector.load %arg2[%c3_8, %c0_9] : memref<6x128xf32, #tpu.memory_space<vmem>>, vector<1x128xf32>
    %12 = vector.broadcast %11 : vector<1x128xf32> to vector<16x128xf32>
    %13 = arith.addf %10, %12 : vector<16x128xf32>
    %cst_10 = arith.constant 0.000000e+00 : f32
    %14 = vector.broadcast %cst_10 : f32 to vector<16x128xf32>
    %15 = arith.maximumf %13, %14 : vector<16x128xf32>
    %16 = arith.truncf %15 : vector<16x128xf32> to vector<16x128xbf16>
    %c4 = arith.constant 4 : index
    %c0_11 = arith.constant 0 : index
    %c0_12 = arith.constant 0 : index
    %17 = vector.load %arg1[%c4, %c0_11, %c0_12] : memref<6x128x128xbf16, #tpu.memory_space<vmem>>, vector<1x128x128xbf16>
    %18 = vector.shape_cast %17 : vector<1x128x128xbf16> to vector<128x128xbf16>
    %cst_13 = arith.constant dense<0.000000e+00> : vector<16x128xf32>
    %19 = tpu.matmul %16, %18, %cst_13 {dimension_numbers = #tpu.dot_dimension_numbers<[1], [0], [0], [1], [0, 0, 1, 1], [], []>} : vector<16x128xbf16>, vector<128x128xbf16>, vector<16x128xf32> -> vector<16x128xf32>
    %c4_14 = arith.constant 4 : index
    %c0_15 = arith.constant 0 : index
    %20 = vector.load %arg2[%c4_14, %c0_15] : memref<6x128xf32, #tpu.memory_space<vmem>>, vector<1x128xf32>
    %21 = vector.broadcast %20 : vector<1x128xf32> to vector<16x128xf32>
    %22 = arith.addf %19, %21 : vector<16x128xf32>
    %cst_16 = arith.constant 0.000000e+00 : f32
    %23 = vector.broadcast %cst_16 : f32 to vector<16x128xf32>
    %24 = arith.maximumf %22, %23 : vector<16x128xf32>
    %25 = arith.truncf %24 : vector<16x128xf32> to vector<16x128xbf16>
    %c5 = arith.constant 5 : index
    %c0_17 = arith.constant 0 : index
    %c0_18 = arith.constant 0 : index
    %26 = vector.load %arg1[%c5, %c0_17, %c0_18] : memref<6x128x128xbf16, #tpu.memory_space<vmem>>, vector<1x128x128xbf16>
    %27 = vector.shape_cast %26 : vector<1x128x128xbf16> to vector<128x128xbf16>
    %cst_19 = arith.constant dense<0.000000e+00> : vector<16x128xf32>
    %28 = tpu.matmul %25, %27, %cst_19 {dimension_numbers = #tpu.dot_dimension_numbers<[1], [0], [0], [1], [0, 0, 1, 1], [], []>} : vector<16x128xbf16>, vector<128x128xbf16>, vector<16x128xf32> -> vector<16x128xf32>
    %c5_20 = arith.constant 5 : index
    %c0_21 = arith.constant 0 : index
    %29 = vector.load %arg2[%c5_20, %c0_21] : memref<6x128xf32, #tpu.memory_space<vmem>>, vector<1x128xf32>
    %30 = vector.broadcast %29 : vector<1x128xf32> to vector<16x128xf32>
    %31 = arith.addf %28, %30 : vector<16x128xf32>
    %cst_22 = arith.constant 0.000000e+00 : f32
    %32 = vector.broadcast %cst_22 : f32 to vector<16x128xf32>
    %33 = arith.maximumf %31, %32 : vector<16x128xf32>
    %34 = math.absf %31 : vector<16x128xf32>
    %cst_23 = arith.constant 0.000000e+00 : f32
    %35 = vector.broadcast %cst_23 : f32 to vector<16x128xf32>
    %36 = arith.subf %35, %34 : vector<16x128xf32>
    %37 = math.exp %36 : vector<16x128xf32>
    %38 = math.log1p %37 : vector<16x128xf32>
    %39 = arith.addf %33, %38 : vector<16x128xf32>
    %c0_24 = arith.constant 0 : index
    %c0_25 = arith.constant 0 : index
    %40 = vector.load %arg3[%c0_24, %c0_25] : memref<16x128xf32, #tpu.memory_space<vmem>>, vector<16x128xf32>
    tpu.vector_store %arg3[%c0_24, %c0_25], %39 {strides = array<i32>} : memref<16x128xf32, #tpu.memory_space<vmem>>, vector<16x128xf32>,
    return
  }
}

</mosaic_0001>

<llo_original>
// kernel: tpu_custom_call.1
$region0: #{tpu_custom_call.1}
  #allocation0 [shape = 'u32[]', space=smem, size = 0x4, offset = 0x4, fixed_abs, tag = 'smem constant byte address 0x4 - core index']
  #allocation1 [shape = 'u32[144,128]{1,0:T(1,128)}', space=vmem, size = 0x12000, scoped, tag = 'internal scratch']
  %s0 = inlined_call_operand.hbm [shape: bf16[16,128], index: 0, kind: input, shape index: {}]
  %s1 = inlined_call_operand.hbm [shape: bf16[6,128,128], index: 1, kind: input, shape index: {}]
  %s2 = inlined_call_operand.hbm [shape: f32[6,128], index: 2, kind: input, shape index: {}]
  %s3 = inlined_call_operand.hbm [shape: f32[16,128], index: 3, kind: output, shape index: {}]
  %s4 = sld [smem:[#allocation0]]
  $region34: #{tpu_custom_call.1} parent=0
    _
  %s6 = ssub.s32 1, %s4
  %s7 = scalar_select 0, %s6, %s4
  $region1: #{tpu_custom_call.1} parent=0
    #allocation2 [shape = 'u8[4096]{0}', space=vmem, size = 0x1000, scoped, tag = 'input window, operand 0, single buffered']
    #allocation3 [shape = 's32[1]{0}', space=sflag, size = 0x4, scoped, tag = 'scoped memory for tpu_custom_call.1']
    #allocation4 [shape = 's32[1]{0}', space=sflag, size = 0x4, scoped, tag = 'scoped memory for tpu_custom_call.1']
    #allocation5 [shape = 'u8[196608]{0}', space=vmem, size = 0x30000, scoped, tag = 'input window, operand 1, single buffered']
    #allocation6 [shape = 's32[1]{0}', space=sflag, size = 0x4, scoped, tag = 'scoped memory for tpu_custom_call.1']
    #allocation7 [shape = 'u8[4096]{0}', space=vmem, size = 0x1000, scoped, tag = 'input window, operand 2, single buffered']
    #allocation8 [shape = 'u8[8192]{0}', space=vmem, size = 0x2000, scoped, tag = 'output window, operand 0, single buffered']
    %8 = vsyncpa [#allocation3], 0
    %9 = vsyncpa [#allocation6], 0
    %10 = vsyncpa [#allocation4], 0
    // Predicated region
    $region2: #{tpu_custom_call.1} parent=1 // pred_check
      _
    $region3: #{tpu_custom_call.1} parent=1 // pred_check_branch
      %12 = sbr.rel (0) target = $region5
    $region4: #{tpu_custom_call.1} parent=1 // pred_region
      %s14 = ssub.s32 128, 128
      %15 = vsyncadd [#allocation3], %s14
      %s16 = sshll.u32 [#allocation2], 4
      %s17 = int_to_ptr.vmem [resolvable:$true] %s16
      %22 = dma.hbm_to_vmem [thread:$0]  %s0, 128, %s17, [#allocation3], 64, 64, 4
    $region5: #{tpu_custom_call.1} parent=1 // pred_fallthru
      _
    // Predicated region
    $region6: #{tpu_custom_call.1} parent=1 // pred_check
      _
    $region7: #{tpu_custom_call.1} parent=1 // pred_check_branch
      %24 = sbr.rel (0) target = $region9
    $region8: #{tpu_custom_call.1} parent=1 // pred_region
      %s26 = ssub.s32 6144, 6144
      %27 = vsyncadd [#allocation6], %s26
      %s28 = sshll.u32 [#allocation5], 4
      %s29 = int_to_ptr.vmem [resolvable:$true] %s28
      %34 = dma.hbm_to_vmem [thread:$0]  %s1, 6144, %s29, [#allocation6], 64, 64, 4
    $region9: #{tpu_custom_call.1} parent=1 // pred_fallthru
      _
    // Predicated region
    $region10: #{tpu_custom_call.1} parent=1 // pred_check
      _
    $region11: #{tpu_custom_call.1} parent=1 // pred_check_branch
      %36 = sbr.rel (0) target = $region13
    $region12: #{tpu_custom_call.1} parent=1 // pred_region
      %s38 = ssub.s32 128, 128
      %39 = vsyncadd [#allocation6], %s38
      %s41 = sshll.u32 [#allocation7], 4
      %s42 = int_to_ptr.vmem [resolvable:$true] %s41
      %44 = dma.hbm_to_vmem [thread:$0]  %s2, 128, %s42, [#allocation6]
    $region13: #{tpu_custom_call.1} parent=1 // pred_fallthru
      _
    // Predicated region
    $region14: #{tpu_custom_call.1} parent=1 // pred_check
      _
    $region15: #{tpu_custom_call.1} parent=1 // pred_check_branch
      %46 = sbr.rel (0) target = $region17
    $region16: #{tpu_custom_call.1} parent=1 // pred_region
      %47 = dma.done [#allocation3], 128
    $region17: #{tpu_custom_call.1} parent=1 // pred_fallthru
      _
    // Predicated region
    $region18: #{tpu_custom_call.1} parent=1 // pred_check
      _
    $region19: #{tpu_custom_call.1} parent=1 // pred_check_branch
      %49 = sbr.rel (0) target = $region21
    $region20: #{tpu_custom_call.1} parent=1 // pred_region
      %50 = dma.done [#allocation6], 6144
    $region21: #{tpu_custom_call.1} parent=1 // pred_fallthru
      _
    // Predicated region
    $region22: #{tpu_custom_call.1} parent=1 // pred_check
      _
    $region23: #{tpu_custom_call.1} parent=1 // pred_check_branch
      %52 = sbr.rel (0) target = $region25
    $region24: #{tpu_custom_call.1} parent=1 // pred_region
      %53 = dma.done [#allocation6], 128
    $region25: #{tpu_custom_call.1} parent=1 // pred_fallthru
      _
    %v55 = vld [vmem:[#allocation2] sm:$0xf]
    %v56 = vld [vmem:[#allocation2 + $0x4] sm:$0xf]
    %s57 = scalar_lea.vmem [#allocation5], 128
    %v58 = vld [vmem:[%s57] sm:$0xf]
    %v59 = vld [vmem:[%s57 + $0x4] sm:$0xf]
    %v60 = vld [vmem:[%s57 + $0x8] sm:$0xf]
    %v61 = vld [vmem:[%s57 + $0xc] sm:$0xf]
    %v62 = vld [vmem:[%s57 + $0x10] sm:$0xf]
    %v63 = vld [vmem:[%s57 + $0x14] sm:$0xf]
    %v64 = vld [vmem:[%s57 + $0x18] sm:$0xf]
    %v65 = vld [vmem:[%s57 + $0x1c] sm:$0xf]
    %v66 = vld [vmem:[%s57 + $0x20] sm:$0xf]
    %v67 = vld [vmem:[%s57 + $0x24] sm:$0xf]
    %v68 = vld [vmem:[%s57 + $0x28] sm:$0xf]
    %v69 = vld [vmem:[%s57 + $0x2c] sm:$0xf]
    %v70 = vld [vmem:[%s57 + $0x30] sm:$0xf]
    %v71 = vld [vmem:[%s57 + $0x34] sm:$0xf]
    %v72 = vld [vmem:[%s57 + $0x38] sm:$0xf]
    %v73 = vld [vmem:[%s57 + $0x3c] sm:$0xf]
    %v74 = vld [vmem:[#allocation7 + $0x2] sm:$0x1]
    %v75 = vlaneseq
    %v76 = vshrl.u32 %v75, 7
    %v77 = vsub.s32 0, %v76
    %v78 = vrot.slane %v74, %v77
    %v81 = vunpack.c.l.b16 %v55
    %v82 = vunpack.c.l.b16 %v56
    %v83 = vpack.c.b16 %v82, %v81
    %v101 = vunpack.c.l.b16 %v58
    %v102 = vunpack.c.l.b16 %v59
    %v103 = vunpack.c.l.b16 %v60
    %v104 = vunpack.c.l.b16 %v61
    %v105 = vunpack.c.l.b16 %v62
    %v106 = vunpack.c.l.b16 %v63
    %v107 = vunpack.c.l.b16 %v64
    %v108 = vunpack.c.l.b16 %v65
    %v109 = vunpack.c.l.b16 %v66
    %v110 = vunpack.c.l.b16 %v67
    %v111 = vunpack.c.l.b16 %v68
    %v112 = vunpack.c.l.b16 %v69
    %v113 = vunpack.c.l.b16 %v70
    %v114 = vunpack.c.l.b16 %v71
    %v115 = vunpack.c.l.b16 %v72
    %v116 = vunpack.c.l.b16 %v73
    %v117 = vpack.c.b16 %v102, %v101
    %v118 = vpack.c.b16 %v104, %v103
    %v119 = vpack.c.b16 %v106, %v105
    %v120 = vpack.c.b16 %v108, %v107
    %v121 = vpack.c.b16 %v110, %v109
    %v122 = vpack.c.b16 %v112, %v111
    %v123 = vpack.c.b16 %v114, %v113
    %v124 = vpack.c.b16 %v116, %v115
    %133 = vmatprep.subr.bf16.mxu0 0
    %134 = vmatpush1.bf16.msra.mxu0 %v117
    %135 = vmatprep.subr.bf16.mxu0 0
    %136 = vmatpush1.bf16.msra.mxu0 %v118
    %137 = vmatprep.subr.bf16.mxu0 0
    %138 = vmatpush1.bf16.msra.mxu0 %v119
    %139 = vmatprep.subr.bf16.mxu0 0
    %140 = vmatpush1.bf16.msra.mxu0 %v120
    %141 = vmatprep.subr.bf16.mxu0 0
    %142 = vmatpush1.bf16.msra.mxu0 %v121
    %143 = vmatprep.subr.bf16.mxu0 0
    %144 = vmatpush1.bf16.msra.mxu0 %v122
    %145 = vmatprep.subr.bf16.mxu0 0
    %146 = vmatpush1.bf16.msra.mxu0 %v123
    %147 = vmatprep.subr.bf16.mxu0 0
    %148 = vmatpush1.bf16.msra.mxu0 %v124
    %149 = vmatprep.subr.bf16.mxu0 0
    %150 = vmatpush1.bf16.msra.mxu0 0
    %151 = vmatprep.subr.bf16.mxu0 0
    %152 = vmatpush1.bf16.msra.mxu0 0
    %153 = vmatprep.subr.bf16.mxu0 0
    %154 = vmatpush1.bf16.msra.mxu0 0
    %155 = vmatprep.subr.bf16.mxu0 0
    %156 = vmatpush1.bf16.msra.mxu0 0
    %157 = vmatprep.subr.bf16.mxu0 0
    %158 = vmatpush1.bf16.msra.mxu0 0
    %159 = vmatprep.subr.bf16.mxu0 0
    %160 = vmatpush1.bf16.msra.mxu0 0
    %161 = vmatprep.subr.bf16.mxu0 0
    %162 = vmatpush1.bf16.msra.mxu0 0
    %163 = vmatprep.subr.bf16.mxu0 0
    %164 = vmatpush1.bf16.msra.mxu0 0
    %165 = vmatprep.mubr.bf16.mxu0 0
    %166 = vmatmul.mubr.bf16.gmra.mrb[0].mxu0 %v83
    %v167 = vpop.f32.mrb[0].mxu0
    %v168 = vadd.f32 %v78, %v167
    %v169 = vpop.f32.mrb[0].mxu0
    %v170 = vpop.f32.mrb[0].mxu0
    %v171 = vadd.f32 %v78, %v170
    %v172 = vpop.f32.mrb[0].mxu0
    %173 = vdwg.mxu0
    %v174 = vpack.c.bf16 %v171, %v168
    %s175 = scalar_lea.vmem [#allocation5], 192
    %v176 = vld [vmem:[%s175] sm:$0xf]
    %v177 = vld [vmem:[%s175 + $0x4] sm:$0xf]
    %v178 = vld [vmem:[%s175 + $0x8] sm:$0xf]
    %v179 = vld [vmem:[%s175 + $0xc] sm:$0xf]
    %v180 = vld [vmem:[%s175 + $0x10] sm:$0xf]
    %v181 = vld [vmem:[%s175 + $0x14] sm:$0xf]
    %v182 = vld [vmem:[%s175 + $0x18] sm:$0xf]
    %v183 = vld [vmem:[%s175 + $0x1c] sm:$0xf]
    %v184 = vld [vmem:[%s175 + $0x20] sm:$0xf]
    %v185 = vld [vmem:[%s175 + $0x24] sm:$0xf]
    %v186 = vld [vmem:[%s175 + $0x28] sm:$0xf]
    %v187 = vld [vmem:[%s175 + $0x2c] sm:$0xf]
    %v188 = vld [vmem:[%s175 + $0x30] sm:$0xf]
    %v189 = vld [vmem:[%s175 + $0x34] sm:$0xf]
    %v190 = vld [vmem:[%s175 + $0x38] sm:$0xf]
    %v191 = vld [vmem:[%s175 + $0x3c] sm:$0xf]
    %v192 = vld [vmem:[#allocation7 + $0x3] sm:$0x1]
    %v193 = vlaneseq
    %v194 = vshrl.u32 %v193, 7
    %v195 = vsub.s32 0, %v194
    %v196 = vrot.slane %v192, %v195
    %v213 = vunpack.c.l.b16 %v176
    %v214 = vunpack.c.l.b16 %v177
    %v215 = vunpack.c.l.b16 %v178
    %v216 = vunpack.c.l.b16 %v179
    %v217 = vunpack.c.l.b16 %v180
    %v218 = vunpack.c.l.b16 %v181
    %v219 = vunpack.c.l.b16 %v182
    %v220 = vunpack.c.l.b16 %v183
    %v221 = vunpack.c.l.b16 %v184
    %v222 = vunpack.c.l.b16 %v185
    %v223 = vunpack.c.l.b16 %v186
    %v224 = vunpack.c.l.b16 %v187
    %v225 = vunpack.c.l.b16 %v188
    %v226 = vunpack.c.l.b16 %v189
    %v227 = vunpack.c.l.b16 %v190
    %v228 = vunpack.c.l.b16 %v191
    %v229 = vpack.c.b16 %v214, %v213
    %v230 = vpack.c.b16 %v216, %v215
    %v231 = vpack.c.b16 %v218, %v217
    %v232 = vpack.c.b16 %v220, %v219
    %v233 = vpack.c.b16 %v222, %v221
    %v234 = vpack.c.b16 %v224, %v223
    %v235 = vpack.c.b16 %v226, %v225
    %v236 = vpack.c.b16 %v228, %v227
    %245 = vmatprep.subr.bf16.mxu0 0
    %246 = vmatpush1.bf16.msra.mxu0 %v229
    %247 = vmatprep.subr.bf16.mxu0 0
    %248 = vmatpush1.bf16.msra.mxu0 %v230
    %249 = vmatprep.subr.bf16.mxu0 0
    %250 = vmatpush1.bf16.msra.mxu0 %v231
    %251 = vmatprep.subr.bf16.mxu0 0
    %252 = vmatpush1.bf16.msra.mxu0 %v232
    %253 = vmatprep.subr.bf16.mxu0 0
    %254 = vmatpush1.bf16.msra.mxu0 %v233
    %255 = vmatprep.subr.bf16.mxu0 0
    %256 = vmatpush1.bf16.msra.mxu0 %v234
    %257 = vmatprep.subr.bf16.mxu0 0
    %258 = vmatpush1.bf16.msra.mxu0 %v235
    %259 = vmatprep.subr.bf16.mxu0 0
    %260 = vmatpush1.bf16.msra.mxu0 %v236
    %261 = vmatprep.subr.bf16.mxu0 0
    %262 = vmatpush1.bf16.msra.mxu0 0
    %263 = vmatprep.subr.bf16.mxu0 0
    %264 = vmatpush1.bf16.msra.mxu0 0
    %265 = vmatprep.subr.bf16.mxu0 0
    %266 = vmatpush1.bf16.msra.mxu0 0
    %267 = vmatprep.subr.bf16.mxu0 0
    %268 = vmatpush1.bf16.msra.mxu0 0
    %269 = vmatprep.subr.bf16.mxu0 0
    %270 = vmatpush1.bf16.msra.mxu0 0
    %271 = vmatprep.subr.bf16.mxu0 0
    %272 = vmatpush1.bf16.msra.mxu0 0
    %273 = vmatprep.subr.bf16.mxu0 0
    %274 = vmatpush1.bf16.msra.mxu0 0
    %275 = vmatprep.subr.bf16.mxu0 0
    %276 = vmatpush1.bf16.msra.mxu0 0
    %277 = vmatprep.mubr.bf16.mxu0 0
    %278 = vmatmul.mubr.bf16.gmra.mrb[0].mxu0 %v174
    %v279 = vpop.f32.mrb[0].mxu0
    %v280 = vadd.f32 %v196, %v279
    %v281 = vpop.f32.mrb[0].mxu0
    %v282 = vpop.f32.mrb[0].mxu0
    %v283 = vadd.f32 %v196, %v282
    %v284 = vpop.f32.mrb[0].mxu0
    %285 = vdwg.mxu0
    %v286 = vmax.f32 %v280, 0.0
    %v287 = vmax.f32 %v283, 0.0
    %v288 = vpack.c.bf16 %v287, %v286
    %s289 = scalar_lea.vmem [#allocation5], 256
    %v290 = vld [vmem:[%s289] sm:$0xf]
    %v291 = vld [vmem:[%s289 + $0x4] sm:$0xf]
    %v292 = vld [vmem:[%s289 + $0x8] sm:$0xf]
    %v293 = vld [vmem:[%s289 + $0xc] sm:$0xf]
    %v294 = vld [vmem:[%s289 + $0x10] sm:$0xf]
    %v295 = vld [vmem:[%s289 + $0x14] sm:$0xf]
    %v296 = vld [vmem:[%s289 + $0x18] sm:$0xf]
    %v297 = vld [vmem:[%s289 + $0x1c] sm:$0xf]
    %v298 = vld [vmem:[%s289 + $0x20] sm:$0xf]
    %v299 = vld [vmem:[%s289 + $0x24] sm:$0xf]
    %v300 = vld [vmem:[%s289 + $0x28] sm:$0xf]
    %v301 = vld [vmem:[%s289 + $0x2c] sm:$0xf]
    %v302 = vld [vmem:[%s289 + $0x30] sm:$0xf]
    %v303 = vld [vmem:[%s289 + $0x34] sm:$0xf]
    %v304 = vld [vmem:[%s289 + $0x38] sm:$0xf]
    %v305 = vld [vmem:[%s289 + $0x3c] sm:$0xf]
    %v306 = vld [vmem:[#allocation7 + $0x4] sm:$0x1]
    %v307 = vlaneseq
    %v308 = vshrl.u32 %v307, 7
    %v309 = vsub.s32 0, %v308
    %v310 = vrot.slane %v306, %v309
    %v327 = vunpack.c.l.b16 %v290
    %v328 = vunpack.c.l.b16 %v291
    %v329 = vunpack.c.l.b16 %v292
    %v330 = vunpack.c.l.b16 %v293
    %v331 = vunpack.c.l.b16 %v294
    %v332 = vunpack.c.l.b16 %v295
    %v333 = vunpack.c.l.b16 %v296
    %v334 = vunpack.c.l.b16 %v297
    %v335 = vunpack.c.l.b16 %v298
    %v336 = vunpack.c.l.b16 %v299
    %v337 = vunpack.c.l.b16 %v300
    %v338 = vunpack.c.l.b16 %v301
    %v339 = vunpack.c.l.b16 %v302
    %v340 = vunpack.c.l.b16 %v303
    %v341 = vunpack.c.l.b16 %v304
    %v342 = vunpack.c.l.b16 %v305
    %v343 = vpack.c.b16 %v328, %v327
    %v344 = vpack.c.b16 %v330, %v329
    %v345 = vpack.c.b16 %v332, %v331
    %v346 = vpack.c.b16 %v334, %v333
    %v347 = vpack.c.b16 %v336, %v335
    %v348 = vpack.c.b16 %v338, %v337
    %v349 = vpack.c.b16 %v340, %v339
    %v350 = vpack.c.b16 %v342, %v341
    %359 = vmatprep.subr.bf16.mxu0 0
    %360 = vmatpush1.bf16.msra.mxu0 %v343
    %361 = vmatprep.subr.bf16.mxu0 0
    %362 = vmatpush1.bf16.msra.mxu0 %v344
    %363 = vmatprep.subr.bf16.mxu0 0
    %364 = vmatpush1.bf16.msra.mxu0 %v345
    %365 = vmatprep.subr.bf16.mxu0 0
    %366 = vmatpush1.bf16.msra.mxu0 %v346
    %367 = vmatprep.subr.bf16.mxu0 0
    %368 = vmatpush1.bf16.msra.mxu0 %v347
    %369 = vmatprep.subr.bf16.mxu0 0
    %370 = vmatpush1.bf16.msra.mxu0 %v348
    %371 = vmatprep.subr.bf16.mxu0 0
    %372 = vmatpush1.bf16.msra.mxu0 %v349
    %373 = vmatprep.subr.bf16.mxu0 0
    %374 = vmatpush1.bf16.msra.mxu0 %v350
    %375 = vmatprep.subr.bf16.mxu0 0
    %376 = vmatpush1.bf16.msra.mxu0 0
    %377 = vmatprep.subr.bf16.mxu0 0
    %378 = vmatpush1.bf16.msra.mxu0 0
    %379 = vmatprep.subr.bf16.mxu0 0
    %380 = vmatpush1.bf16.msra.mxu0 0
    %381 = vmatprep.subr.bf16.mxu0 0
    %382 = vmatpush1.bf16.msra.mxu0 0
    %383 = vmatprep.subr.bf16.mxu0 0
    %384 = vmatpush1.bf16.msra.mxu0 0
    %385 = vmatprep.subr.bf16.mxu0 0
    %386 = vmatpush1.bf16.msra.mxu0 0
    %387 = vmatprep.subr.bf16.mxu0 0
    %388 = vmatpush1.bf16.msra.mxu0 0
    %389 = vmatprep.subr.bf16.mxu0 0
    %390 = vmatpush1.bf16.msra.mxu0 0
    %391 = vmatprep.mubr.bf16.mxu0 0
    %392 = vmatmul.mubr.bf16.gmra.mrb[0].mxu0 %v288
    %v393 = vpop.f32.mrb[0].mxu0
    %v394 = vadd.f32 %v310, %v393
    %v395 = vpop.f32.mrb[0].mxu0
    %v396 = vpop.f32.mrb[0].mxu0
    %v397 = vadd.f32 %v310, %v396
    %v398 = vpop.f32.mrb[0].mxu0
    %399 = vdwg.mxu0
    %v400 = vmax.f32 %v394, 0.0
    %v401 = vmax.f32 %v397, 0.0
    %v402 = vpack.c.bf16 %v401, %v400
    %s403 = scalar_lea.vmem [#allocation5], 320
    %v404 = vld [vmem:[%s403] sm:$0xf]
    %v405 = vld [vmem:[%s403 + $0x4] sm:$0xf]
    %v406 = vld [vmem:[%s403 + $0x8] sm:$0xf]
    %v407 = vld [vmem:[%s403 + $0xc] sm:$0xf]
    %v408 = vld [vmem:[%s403 + $0x10] sm:$0xf]
    %v409 = vld [vmem:[%s403 + $0x14] sm:$0xf]
    %v410 = vld [vmem:[%s403 + $0x18] sm:$0xf]
    %v411 = vld [vmem:[%s403 + $0x1c] sm:$0xf]
    %v412 = vld [vmem:[%s403 + $0x20] sm:$0xf]
    %v413 = vld [vmem:[%s403 + $0x24] sm:$0xf]
    %v414 = vld [vmem:[%s403 + $0x28] sm:$0xf]
    %v415 = vld [vmem:[%s403 + $0x2c] sm:$0xf]
    %v416 = vld [vmem:[%s403 + $0x30] sm:$0xf]
    %v417 = vld [vmem:[%s403 + $0x34] sm:$0xf]
    %v418 = vld [vmem:[%s403 + $0x38] sm:$0xf]
    %v419 = vld [vmem:[%s403 + $0x3c] sm:$0xf]
    %v420 = vld [vmem:[#allocation7 + $0x5] sm:$0x1]
    %v421 = vlaneseq
    %v422 = vshrl.u32 %v421, 7
    %v423 = vsub.s32 0, %v422
    %v424 = vrot.slane %v420, %v423
    %v441 = vunpack.c.l.b16 %v404
    %v442 = vunpack.c.l.b16 %v405
    %v443 = vunpack.c.l.b16 %v406
    %v444 = vunpack.c.l.b16 %v407
    %v445 = vunpack.c.l.b16 %v408
    %v446 = vunpack.c.l.b16 %v409
    %v447 = vunpack.c.l.b16 %v410
    %v448 = vunpack.c.l.b16 %v411
    %v449 = vunpack.c.l.b16 %v412
    %v450 = vunpack.c.l.b16 %v413
    %v451 = vunpack.c.l.b16 %v414
    %v452 = vunpack.c.l.b16 %v415
    %v453 = vunpack.c.l.b16 %v416
    %v454 = vunpack.c.l.b16 %v417
    %v455 = vunpack.c.l.b16 %v418
    %v456 = vunpack.c.l.b16 %v419
    %v457 = vpack.c.b16 %v442, %v441
    %v458 = vpack.c.b16 %v444, %v443
    %v459 = vpack.c.b16 %v446, %v445
    %v460 = vpack.c.b16 %v448, %v447
    %v461 = vpack.c.b16 %v450, %v449
    %v462 = vpack.c.b16 %v452, %v451
    %v463 = vpack.c.b16 %v454, %v453
    %v464 = vpack.c.b16 %v456, %v455
    %473 = vmatprep.subr.bf16.mxu0 0
    %474 = vmatpush1.bf16.msra.mxu0 %v457
    %475 = vmatprep.subr.bf16.mxu0 0
    %476 = vmatpush1.bf16.msra.mxu0 %v458
    %477 = vmatprep.subr.bf16.mxu0 0
    %478 = vmatpush1.bf16.msra.mxu0 %v459
    %479 = vmatprep.subr.bf16.mxu0 0
    %480 = vmatpush1.bf16.msra.mxu0 %v460
    %481 = vmatprep.subr.bf16.mxu0 0
    %482 = vmatpush1.bf16.msra.mxu0 %v461
    %483 = vmatprep.subr.bf16.mxu0 0
    %484 = vmatpush1.bf16.msra.mxu0 %v462
    %485 = vmatprep.subr.bf16.mxu0 0
    %486 = vmatpush1.bf16.msra.mxu0 %v463
    %487 = vmatprep.subr.bf16.mxu0 0
    %488 = vmatpush1.bf16.msra.mxu0 %v464
    %489 = vmatprep.subr.bf16.mxu0 0
    %490 = vmatpush1.bf16.msra.mxu0 0
    %491 = vmatprep.subr.bf16.mxu0 0
    %492 = vmatpush1.bf16.msra.mxu0 0
    %493 = vmatprep.subr.bf16.mxu0 0
    %494 = vmatpush1.bf16.msra.mxu0 0
    %495 = vmatprep.subr.bf16.mxu0 0
    %496 = vmatpush1.bf16.msra.mxu0 0
    %497 = vmatprep.subr.bf16.mxu0 0
    %498 = vmatpush1.bf16.msra.mxu0 0
    %499 = vmatprep.subr.bf16.mxu0 0
    %500 = vmatpush1.bf16.msra.mxu0 0
    %501 = vmatprep.subr.bf16.mxu0 0
    %502 = vmatpush1.bf16.msra.mxu0 0
    %503 = vmatprep.subr.bf16.mxu0 0
    %504 = vmatpush1.bf16.msra.mxu0 0
    %505 = vmatprep.mubr.bf16.mxu0 0
    %506 = vmatmul.mubr.bf16.gmra.mrb[0].mxu0 %v402
    %v507 = vpop.f32.mrb[0].mxu0
    %v508 = vadd.f32 %v424, %v507
    %v509 = vpop.f32.mrb[0].mxu0
    %v510 = vpop.f32.mrb[0].mxu0
    %v511 = vadd.f32 %v424, %v510
    %v512 = vpop.f32.mrb[0].mxu0
    %513 = vdwg.mxu0
    %v514 = vmax.f32 %v508, 0.0
    %v515 = vmax.f32 %v511, 0.0
    %v516 = vand.u32 2147483647, %v508
    %v517 = vand.u32 2147483647, %v511
    %v518 = vsub.f32 0.0, %v516
    %v519 = vsub.f32 0.0, %v517
    %v520 = vmul.f32 %v518, 1.442695
    %v521 = vpow.pop %v520
    %v522 = vmul.f32 %v519, 1.442695
    %v523 = vpow.pop %v522
    %v524 = vadd.f32 %v521, 1.0
    %v525 = vlog2.pop %v524
    %v526 = vmul.f32 %v525, 0.6931472
    %v527 = vmul.f32 -0.5, %v521
    %v528 = vadd.f32 %v527, 1.0
    %v529 = vmul.f32 %v528, %v521
    %v530 = vand.u32 2147483647, %v521
    %vm531 = vcmp.lt.f32.partialorder %v530, 0.0004427343
    %v532 = vsel %vm531, %v529, %v526
    %v533 = vadd.f32 %v523, 1.0
    %v534 = vlog2.pop %v533
    %v535 = vmul.f32 %v534, 0.6931472
    %v536 = vmul.f32 -0.5, %v523
    %v537 = vadd.f32 %v536, 1.0
    %v538 = vmul.f32 %v537, %v523
    %v539 = vand.u32 2147483647, %v523
    %vm540 = vcmp.lt.f32.partialorder %v539, 0.0004427343
    %v541 = vsel %vm540, %v538, %v535
    %v542 = vadd.f32 %v514, %v532
    %v543 = vadd.f32 %v515, %v541
    %544 = vst [vmem:[#allocation8] sm:$0xff] %v542
    %545 = vst [vmem:[#allocation8 + $0x8] sm:$0xff] %v543
    // Predicated region
    $region26: #{tpu_custom_call.1} parent=1 // pred_check
      _
    $region27: #{tpu_custom_call.1} parent=1 // pred_check_branch
      %547 = sbr.rel (0) target = $region29
    $region28: #{tpu_custom_call.1} parent=1 // pred_region
      %s549 = ssub.s32 256, 256
      %550 = vsyncadd [#allocation4], %s549
      %s551 = sshll.u32 [#allocation8], 4
      %s552 = int_to_ptr.vmem [resolvable:$true] %s551
      %557 = dma.vmem_to_hbm [thread:$0]  %s552, 256, %s3, [#allocation4], 128, 128, 8
    $region29: #{tpu_custom_call.1} parent=1 // pred_fallthru
      _
    // Predicated region
    $region30: #{tpu_custom_call.1} parent=1 // pred_check
      _
    $region31: #{tpu_custom_call.1} parent=1 // pred_check_branch
      %559 = sbr.rel (0) target = $region33
    $region32: #{tpu_custom_call.1} parent=1 // pred_region
      %560 = dma.done [#allocation4], 256
    $region33: #{tpu_custom_call.1} parent=1 // pred_fallthru
      _
    %561 = vsyncpa [#allocation3], 1
    %562 = vsyncpa [#allocation6], 1
    %563 = vsyncpa [#allocation4], 1

</llo_original>
